<compile_context>
chip_gen: v5e
topology: v5e:2x2
jax: 0.10.0
libtpu: 0.0.40
codegen_flags: <defaults>
</compile_context>

<pallas_src>
import jax
import jax.numpy as jnp
from jax.experimental import pallas as pl
from jax.experimental.pallas import tpu as pltpu

H1, H2 = 400, 300          # logical hidden sizes of the PyTorch module
LANE = 128


def _round_up(x, m):
    return ((x + m - 1) // m) * m


def _critic_kernel(s_ref, a_ref, w1s_ref, w1a_ref, b1_ref, w2_ref, b2_ref,
                   w3_ref, b3_ref, out_ref):
    wdt = w1s_ref.dtype
    s = s_ref[...].astype(wdt)
    a = a_ref[...].astype(wdt)

    # layer1 on the split inputs (replaces concat + single matmul).
    h1 = (jnp.dot(s, w1s_ref[...], preferred_element_type=jnp.float32)
          + jnp.dot(a, w1a_ref[...], preferred_element_type=jnp.float32)
          + b1_ref[...])
    h1 = jnp.maximum(h1, 0.0)

    # layer2
    h2 = (jnp.dot(h1.astype(wdt), w2_ref[...],
                  preferred_element_type=jnp.float32)
          + b2_ref[...])
    h2 = jnp.maximum(h2, 0.0)

    # layer3 (out_features == 1): VPU multiply + XLU reduction instead of a
    # degenerate N=1 MXU matmul.
    out_ref[...] = (jnp.sum(h2 * w3_ref[...], axis=-1, keepdims=True)
                    + b3_ref[...])


def init_critic_params(key, state_dim, action_dim):
    """PyTorch-layout params, nn.Linear default init U(-1/sqrt(fan_in), +)."""
    dims = [(H1, state_dim + action_dim), (H2, H1), (1, H2)]
    params = []
    for i, (out_d, in_d) in enumerate(dims):
        kw, kb = jax.random.split(jax.random.fold_in(key, i))
        bound = 1.0 / jnp.sqrt(jnp.float32(in_d))
        w = jax.random.uniform(kw, (out_d, in_d), jnp.float32, -bound, bound)
        b = jax.random.uniform(kb, (out_d,), jnp.float32, -bound, bound)
        params += [w, b]
    return tuple(params)


def prepare_critic_params(params, state_dim, weight_dtype=jnp.float32):
    """One-time conversion: transpose, split layer-1, zero-pad to lane multiples.

    weight_dtype=jnp.bfloat16 halves DMA volume / doubles MXU throughput on
    v5e/v6e; accumulation stays f32 in the kernel either way.
    """
    w1, b1, w2, b2, w3, b3 = params
    h1p, h2p = _round_up(H1, LANE), _round_up(H2, LANE)

    w1t = w1.T                                    # (S+A, H1)
    w1s = jnp.zeros((state_dim, h1p), jnp.float32).at[:, :H1].set(
        w1t[:state_dim])
    w1a = jnp.zeros((w1t.shape[0] - state_dim, h1p), jnp.float32).at[:, :H1].set(
        w1t[state_dim:])
    b1p = jnp.zeros((1, h1p), jnp.float32).at[:, :H1].set(b1.reshape(1, -1))

    w2p = jnp.zeros((h1p, h2p), jnp.float32).at[:H1, :H2].set(w2.T)
    b2p = jnp.zeros((1, h2p), jnp.float32).at[:, :H2].set(b2.reshape(1, -1))

    w3row = jnp.zeros((1, h2p), jnp.float32).at[:, :H2].set(w3.reshape(1, -1))
    b3p = b3.reshape(1, 1).astype(jnp.float32)

    return (w1s.astype(weight_dtype), w1a.astype(weight_dtype), b1p,
            w2p.astype(weight_dtype), b2p, w3row, b3p)


def critic_forward(state, action, prepped):
    """Pallas implementation of Critic.forward(state, action)."""
    w1s, w1a, b1, w2, b2, w3row, b3 = prepped
    B, S = state.shape
    _, A = action.shape
    h1p, h2p = w1s.shape[1], w2.shape[1]

    # Batch tiling: pipeline activation DMAs / allow TC sharding at large B,
    # fall back to one tile (rounded up to a sublane multiple) at small B.
    TB = 256 if B >= 256 else _round_up(B, 8)
    Bp = _round_up(B, TB)
    if Bp != B:
        state = jnp.pad(state, ((0, Bp - B), (0, 0)))
        action = jnp.pad(action, ((0, Bp - B), (0, 0)))
    grid = (Bp // TB,)

    batch_spec = lambda cols: pl.BlockSpec((TB, cols), lambda i: (i, 0))
    full_spec = lambda shape: pl.BlockSpec(shape, lambda i: (0, 0))

    itemsize = jnp.dtype(w1s.dtype).itemsize
    flops = 2 * Bp * (S * h1p + A * h1p + h1p * h2p + h2p)
    bytes_accessed = (4 * (Bp * (S + A) + Bp + h1p + h2p + h2p + 1)
                      + itemsize * (S * h1p + A * h1p + h1p * h2p))
    cost = pl.CostEstimate(flops=flops, transcendentals=0,
                           bytes_accessed=bytes_accessed)

    out = pl.pallas_call(
        _critic_kernel,
        out_shape=jax.ShapeDtypeStruct((Bp, 1), jnp.float32),
        grid=grid,
        in_specs=[
            batch_spec(S),            # state tile
            batch_spec(A),            # action tile
            full_spec(w1s.shape),     # weights stay resident (<1.5 MB total)
            full_spec(w1a.shape),
            full_spec(b1.shape),
            full_spec(w2.shape),
            full_spec(b2.shape),
            full_spec(w3row.shape),
            full_spec(b3.shape),
        ],
        out_specs=batch_spec(1),
        compiler_params=pltpu.CompilerParams(
            dimension_semantics=("parallel",)),
        cost_estimate=cost,
    )(state, action, w1s, w1a, b1, w2, b2, w3row, b3)
    return out[:B]


def _reference_forward(state, action, params):
    w1, b1, w2, b2, w3, b3 = params
    x = jnp.concatenate([state, action], axis=1)
    x = jnp.maximum(x @ w1.T + b1, 0.0)
    x = jnp.maximum(x @ w2.T + b2, 0.0)
    return x @ w3.T + b3


if __name__ == "__main__":
    key = jax.random.PRNGKey(0)
    k_s, k_a, k_p = jax.random.split(key, 3)

    batch, state_dim, action_dim = 8, 16, 4
    state = jax.random.normal(k_s, (batch, state_dim), jnp.float32)
    action = jax.random.normal(k_a, (batch, action_dim), jnp.float32)

    params = init_critic_params(k_p, state_dim, action_dim)
    # One-time layout conversion (transpose / split / pad) — NOT per forward.
    prepped = prepare_critic_params(params, state_dim,
                                    weight_dtype=jnp.float32)

    out = critic_forward(state, action, prepped)
    out = jax.block_until_ready(out)

    ref = _reference_forward(state, action, params)
    assert out.shape == (batch, 1), out.shape
    assert jnp.allclose(out, ref, atol=1e-4, rtol=1e-4), "mismatch vs reference"
    print("KERNEL_OK")
</pallas_src>

<mosaic_0001>
module attributes {stable_mosaic.version = 11 : i64} {
  func.func @_critic_kernel(%arg0: i32, %arg1: memref<8x16xf32, #tpu.memory_space<vmem>>, %arg2: memref<8x4xf32, #tpu.memory_space<vmem>>, %arg3: memref<16x512xf32, #tpu.memory_space<vmem>>, %arg4: memref<4x512xf32, #tpu.memory_space<vmem>>, %arg5: memref<1x512xf32, #tpu.memory_space<vmem>>, %arg6: memref<512x384xf32, #tpu.memory_space<vmem>>, %arg7: memref<1x384xf32, #tpu.memory_space<vmem>>, %arg8: memref<1x384xf32, #tpu.memory_space<vmem>>, %arg9: memref<1x1xf32, #tpu.memory_space<vmem>>, %arg10: memref<8x1xf32, #tpu.memory_space<vmem>>) attributes {dimension_semantics = [#tpu.dimension_semantics<parallel>], iteration_bounds = array<i64: 1>, scalar_prefetch = 0 : i64, scratch_operands = 0 : i64, tpu.core_type = #tpu.core_type<tc>, window_params = [{transform_indices = @transform_0, window_bounds = array<i64: 8, 16>}, {transform_indices = @transform_1, window_bounds = array<i64: 8, 4>}, {pipeline_mode = #tpu.pipeline_mode<synchronous>, transform_indices = @transform_2, window_bounds = array<i64: 16, 512>}, {pipeline_mode = #tpu.pipeline_mode<synchronous>, transform_indices = @transform_3, window_bounds = array<i64: 4, 512>}, {pipeline_mode = #tpu.pipeline_mode<synchronous>, transform_indices = @transform_4, window_bounds = array<i64: 1, 512>}, {pipeline_mode = #tpu.pipeline_mode<synchronous>, transform_indices = @transform_5, window_bounds = array<i64: 512, 384>}, {pipeline_mode = #tpu.pipeline_mode<synchronous>, transform_indices = @transform_6, window_bounds = array<i64: 1, 384>}, {pipeline_mode = #tpu.pipeline_mode<synchronous>, transform_indices = @transform_7, window_bounds = array<i64: 1, 384>}, {pipeline_mode = #tpu.pipeline_mode<synchronous>, transform_indices = @transform_8, window_bounds = array<i64: 1, 1>}, {transform_indices = @transform_9, window_bounds = array<i64: 8, 1>}]} {
    %c0 = arith.constant 0 : index
    %c0_0 = arith.constant 0 : index
    %0 = vector.load %arg1[%c0, %c0_0] : memref<8x16xf32, #tpu.memory_space<vmem>>, vector<8x16xf32>
    %c0_1 = arith.constant 0 : index
    %c0_2 = arith.constant 0 : index
    %1 = vector.load %arg2[%c0_1, %c0_2] : memref<8x4xf32, #tpu.memory_space<vmem>>, vector<8x4xf32>
    %c0_3 = arith.constant 0 : index
    %c0_4 = arith.constant 0 : index
    %2 = vector.load %arg3[%c0_3, %c0_4] : memref<16x512xf32, #tpu.memory_space<vmem>>, vector<16x512xf32>
    %cst = arith.constant dense<0.000000e+00> : vector<8x512xf32>
    %3 = tpu.matmul %0, %2, %cst {dimension_numbers = #tpu.dot_dimension_numbers<[1], [0], [0], [1], [0, 0, 1, 1], [], []>} : vector<8x16xf32>, vector<16x512xf32>, vector<8x512xf32> -> vector<8x512xf32>
    %c0_5 = arith.constant 0 : index
    %c0_6 = arith.constant 0 : index
    %4 = vector.load %arg4[%c0_5, %c0_6] : memref<4x512xf32, #tpu.memory_space<vmem>>, vector<4x512xf32>
    %cst_7 = arith.constant dense<0.000000e+00> : vector<8x512xf32>
    %5 = tpu.matmul %1, %4, %cst_7 {dimension_numbers = #tpu.dot_dimension_numbers<[1], [0], [0], [1], [0, 0, 1, 1], [], []>} : vector<8x4xf32>, vector<4x512xf32>, vector<8x512xf32> -> vector<8x512xf32>
    %6 = arith.addf %3, %5 : vector<8x512xf32>
    %c0_8 = arith.constant 0 : index
    %c0_9 = arith.constant 0 : index
    %7 = vector.load %arg5[%c0_8, %c0_9] : memref<1x512xf32, #tpu.memory_space<vmem>>, vector<1x512xf32>
    %8 = vector.broadcast %7 : vector<1x512xf32> to vector<8x512xf32>
    %9 = arith.addf %6, %8 : vector<8x512xf32>
    %cst_10 = arith.constant 0.000000e+00 : f32
    %10 = vector.broadcast %cst_10 : f32 to vector<8x512xf32>
    %11 = arith.maximumf %9, %10 : vector<8x512xf32>
    %c0_11 = arith.constant 0 : index
    %c0_12 = arith.constant 0 : index
    %12 = vector.load %arg6[%c0_11, %c0_12] : memref<512x384xf32, #tpu.memory_space<vmem>>, vector<512x384xf32>
    %cst_13 = arith.constant dense<0.000000e+00> : vector<8x384xf32>
    %13 = tpu.matmul %11, %12, %cst_13 {dimension_numbers = #tpu.dot_dimension_numbers<[1], [0], [0], [1], [0, 0, 1, 1], [], []>} : vector<8x512xf32>, vector<512x384xf32>, vector<8x384xf32> -> vector<8x384xf32>
    %c0_14 = arith.constant 0 : index
    %c0_15 = arith.constant 0 : index
    %14 = vector.load %arg7[%c0_14, %c0_15] : memref<1x384xf32, #tpu.memory_space<vmem>>, vector<1x384xf32>
    %15 = vector.broadcast %14 : vector<1x384xf32> to vector<8x384xf32>
    %16 = arith.addf %13, %15 : vector<8x384xf32>
    %cst_16 = arith.constant 0.000000e+00 : f32
    %17 = vector.broadcast %cst_16 : f32 to vector<8x384xf32>
    %18 = arith.maximumf %16, %17 : vector<8x384xf32>
    %c0_17 = arith.constant 0 : index
    %c0_18 = arith.constant 0 : index
    %19 = vector.load %arg8[%c0_17, %c0_18] : memref<1x384xf32, #tpu.memory_space<vmem>>, vector<1x384xf32>
    %20 = vector.broadcast %19 : vector<1x384xf32> to vector<8x384xf32>
    %21 = arith.mulf %18, %20 : vector<8x384xf32>
    %cst_19 = arith.constant dense<0.000000e+00> : vector<8xf32>
    %22 = vector.multi_reduction <add>, %21, %cst_19 [1] : vector<8x384xf32> to vector<8xf32>
    %23 = vector.shape_cast %22 : vector<8xf32> to vector<8x1xf32>
    %c0_20 = arith.constant 0 : index
    %c0_21 = arith.constant 0 : index
    %24 = vector.load %arg9[%c0_20, %c0_21] : memref<1x1xf32, #tpu.memory_space<vmem>>, vector<1x1xf32>
    %25 = vector.broadcast %24 : vector<1x1xf32> to vector<8x1xf32>
    %26 = arith.addf %23, %25 : vector<8x1xf32>
    %c0_22 = arith.constant 0 : index
    %c0_23 = arith.constant 0 : index
    %27 = vector.load %arg10[%c0_22, %c0_23] : memref<8x1xf32, #tpu.memory_space<vmem>>, vector<8x1xf32>
    tpu.vector_store %arg10[%c0_22, %c0_23], %26 {strides = array<i32>} : memref<8x1xf32, #tpu.memory_space<vmem>>, vector<8x1xf32>,
    return
  }
  func.func @transform_0(%arg0: i32) -> (i32, i32) {
    %c0_i32 = arith.constant 0 : i32
    %c0_i32_0 = arith.constant 0 : i32
    return %arg0, %c0_i32 : i32, i32
  }
  func.func @transform_1(%arg0: i32) -> (i32, i32) {
    %c0_i32 = arith.constant 0 : i32
    %c0_i32_0 = arith.constant 0 : i32
    return %arg0, %c0_i32 : i32, i32
  }
  func.func @transform_2(%arg0: i32) -> (i32, i32) {
    %c0_i32 = arith.constant 0 : i32
    %c0_i32_0 = arith.constant 0 : i32
    %c0_i32_1 = arith.constant 0 : i32
    return %c0_i32, %c0_i32_0 : i32, i32
  }
  func.func @transform_3(%arg0: i32) -> (i32, i32) {
    %c0_i32 = arith.constant 0 : i32
    %c0_i32_0 = arith.constant 0 : i32
    %c0_i32_1 = arith.constant 0 : i32
    return %c0_i32, %c0_i32_0 : i32, i32
  }
  func.func @transform_4(%arg0: i32) -> (i32, i32) {
    %c0_i32 = arith.constant 0 : i32
    %c0_i32_0 = arith.constant 0 : i32
    %c0_i32_1 = arith.constant 0 : i32
    return %c0_i32, %c0_i32_0 : i32, i32
  }
  func.func @transform_5(%arg0: i32) -> (i32, i32) {
    %c0_i32 = arith.constant 0 : i32
    %c0_i32_0 = arith.constant 0 : i32
    %c0_i32_1 = arith.constant 0 : i32
    return %c0_i32, %c0_i32_0 : i32, i32
  }
  func.func @transform_6(%arg0: i32) -> (i32, i32) {
    %c0_i32 = arith.constant 0 : i32
    %c0_i32_0 = arith.constant 0 : i32
    %c0_i32_1 = arith.constant 0 : i32
    return %c0_i32, %c0_i32_0 : i32, i32
  }
  func.func @transform_7(%arg0: i32) -> (i32, i32) {
    %c0_i32 = arith.constant 0 : i32
    %c0_i32_0 = arith.constant 0 : i32
    %c0_i32_1 = arith.constant 0 : i32
    return %c0_i32, %c0_i32_0 : i32, i32
  }
  func.func @transform_8(%arg0: i32) -> (i32, i32) {
    %c0_i32 = arith.constant 0 : i32
    %c0_i32_0 = arith.constant 0 : i32
    %c0_i32_1 = arith.constant 0 : i32
    return %c0_i32, %c0_i32_0 : i32, i32
  }
  func.func @transform_9(%arg0: i32) -> (i32, i32) {
    %c0_i32 = arith.constant 0 : i32
    %c0_i32_0 = arith.constant 0 : i32
    return %arg0, %c0_i32 : i32, i32
  }
}

</mosaic_0001>

<llo_original>
// kernel: tpu_custom_call.1
$region0: #{tpu_custom_call.1}
  #allocation0 [shape = 'u32[]', space=smem, size = 0x4, offset = 0x4, fixed_abs, tag = 'smem constant byte address 0x4 - core index']
  #allocation1 [shape = 'u32[72,128]{1,0:T(1,128)}', space=vmem, size = 0x9000, scoped, tag = 'internal scratch']
  #allocation2 [shape = 'f32[1,1]{1,0:T(1,128)S(1)}', space=vmem, size = 0x200, scoped, tag = 'scoped memory for tpu_custom_call.1']
  %s0 = inlined_call_operand.hbm [shape: f32[8,16], index: 0, kind: input, shape index: {}]
  %s1 = inlined_call_operand.vmem [shape: f32[8,4], index: 1, kind: input, shape index: {}]
  %s2 = inlined_call_operand.hbm [shape: f32[16,512], index: 2, kind: input, shape index: {}]
  %s3 = inlined_call_operand.vmem [shape: f32[4,512], index: 3, kind: input, shape index: {}]
  %s4 = inlined_call_operand.hbm [shape: f32[1,512], index: 4, kind: input, shape index: {}]
  %s5 = inlined_call_operand.hbm [shape: f32[512,384], index: 5, kind: input, shape index: {}]
  %s6 = inlined_call_operand.vmem [shape: f32[1,384], index: 6, kind: input, shape index: {}]
  %s7 = inlined_call_operand.hbm [shape: f32[1,384], index: 7, kind: input, shape index: {}]
  %s8 = inlined_call_operand.<no memory space> [shape: f32[1,1], index: 8, kind: input, shape index: {}]
  %s9 = inlined_call_operand.vmem [shape: f32[8,1], index: 9, kind: output, shape index: {}]
  %s10 = sld [smem:[#allocation0]]
  $region66: #{tpu_custom_call.1} parent=0
    _
  %s12 = ssub.s32 1, %s10
  %s13 = scalar_select 0, %s12, %s10
  %v14 = vstv %s8
  %15 = vst [vmem:[#allocation2] sm:$0x1] %v14
  $region1: #{tpu_custom_call.1} parent=0
    #allocation3 [shape = 'u8[4096]{0}', space=vmem, size = 0x1000, scoped, tag = 'input window, operand 0, single buffered']
    #allocation4 [shape = 's32[1]{0}', space=sflag, size = 0x4, scoped, tag = 'scoped memory for tpu_custom_call.1']
    #allocation5 [shape = 'u8[32768]{0}', space=vmem, size = 0x8000, scoped, tag = 'input window, operand 2, single buffered']
    #allocation6 [shape = 's32[1]{0}', space=sflag, size = 0x4, scoped, tag = 'scoped memory for tpu_custom_call.1']
    #allocation7 [shape = 'u8[2048]{0}', space=vmem, size = 0x800, scoped, tag = 'input window, operand 4, single buffered']
    #allocation8 [shape = 'u8[786432]{0}', space=vmem, size = 0xc0000, scoped, tag = 'input window, operand 5, single buffered']
    #allocation9 [shape = 's32[1]{0}', space=sflag, size = 0x4, scoped, tag = 'scoped memory for tpu_custom_call.1']
    #allocation10 [shape = 'u8[1536]{0}', space=vmem, size = 0x800, scoped, tag = 'input window, operand 7, single buffered']
    %16 = vsyncpa [#allocation4], 0
    %17 = vsyncpa [#allocation6], 0
    %18 = vsyncpa [#allocation9], 0
    // Predicated region
    $region2: #{tpu_custom_call.1} parent=1 // pred_check
      _
    $region3: #{tpu_custom_call.1} parent=1 // pred_check_branch
      %20 = sbr.rel (0) target = $region5
    $region4: #{tpu_custom_call.1} parent=1 // pred_region
      %22 = vsyncadd [#allocation4], 0
      %s24 = sshll.u32 %s0, 4
      %s25 = int_to_ptr.hbm [resolvable:$true] %s24
      %s26 = sshll.u32 [#allocation3], 4
      %s27 = int_to_ptr.vmem [resolvable:$true] %s26
      %29 = dma.hbm_to_vmem [thread:$0]  %s25, 128, %s27, [#allocation4]
    $region5: #{tpu_custom_call.1} parent=1 // pred_fallthru
      _
    // Predicated region
    $region6: #{tpu_custom_call.1} parent=1 // pred_check
      _
    $region7: #{tpu_custom_call.1} parent=1 // pred_check_branch
      %31 = sbr.rel (0) target = $region9
    $region8: #{tpu_custom_call.1} parent=1 // pred_region
      _
    $region9: #{tpu_custom_call.1} parent=1 // pred_fallthru
      _
    // Predicated region
    $region10: #{tpu_custom_call.1} parent=1 // pred_check
      _
    $region11: #{tpu_custom_call.1} parent=1 // pred_check_branch
      %33 = sbr.rel (0) target = $region13
    $region12: #{tpu_custom_call.1} parent=1 // pred_region
      %35 = vsyncadd [#allocation6], 0
      %s36 = sshll.u32 %s2, 4
      %s37 = int_to_ptr.hbm [resolvable:$true] %s36
      %s38 = sshll.u32 [#allocation5], 4
      %s39 = int_to_ptr.vmem [resolvable:$true] %s38
      %44 = dma.hbm_to_vmem [thread:$0]  %s37, 1024, %s39, [#allocation6], 512, 512, 32
    $region13: #{tpu_custom_call.1} parent=1 // pred_fallthru
      _
    // Predicated region
    $region14: #{tpu_custom_call.1} parent=1 // pred_check
      _
    $region15: #{tpu_custom_call.1} parent=1 // pred_check_branch
      %46 = sbr.rel (0) target = $region17
    $region16: #{tpu_custom_call.1} parent=1 // pred_region
      _
    $region17: #{tpu_custom_call.1} parent=1 // pred_fallthru
      _
    // Predicated region
    $region18: #{tpu_custom_call.1} parent=1 // pred_check
      _
    $region19: #{tpu_custom_call.1} parent=1 // pred_check_branch
      %48 = sbr.rel (0) target = $region21
    $region20: #{tpu_custom_call.1} parent=1 // pred_region
      %50 = vsyncadd [#allocation6], 0
      %s52 = sshll.u32 %s4, 4
      %s53 = int_to_ptr.hbm [resolvable:$true] %s52
      %s54 = sshll.u32 [#allocation7], 4
      %s55 = int_to_ptr.vmem [resolvable:$true] %s54
      %57 = dma.hbm_to_vmem [thread:$0]  %s53, 64, %s55, [#allocation6]
    $region21: #{tpu_custom_call.1} parent=1 // pred_fallthru
      _
    // Predicated region
    $region22: #{tpu_custom_call.1} parent=1 // pred_check
      _
    $region23: #{tpu_custom_call.1} parent=1 // pred_check_branch
      %59 = sbr.rel (0) target = $region25
    $region24: #{tpu_custom_call.1} parent=1 // pred_region
      %61 = vsyncadd [#allocation9], 0
      %s62 = sshll.u32 %s5, 4
      %s63 = int_to_ptr.hbm [resolvable:$true] %s62
      %s64 = sshll.u32 [#allocation8], 4
      %s65 = int_to_ptr.vmem [resolvable:$true] %s64
      %70 = dma.hbm_to_vmem [thread:$0]  %s63, 24576, %s65, [#allocation9], 384, 384, 24
    $region25: #{tpu_custom_call.1} parent=1 // pred_fallthru
      _
    // Predicated region
    $region26: #{tpu_custom_call.1} parent=1 // pred_check
      _
    $region27: #{tpu_custom_call.1} parent=1 // pred_check_branch
      %72 = sbr.rel (0) target = $region29
    $region28: #{tpu_custom_call.1} parent=1 // pred_region
      _
    $region29: #{tpu_custom_call.1} parent=1 // pred_fallthru
      _
    // Predicated region
    $region30: #{tpu_custom_call.1} parent=1 // pred_check
      _
    $region31: #{tpu_custom_call.1} parent=1 // pred_check_branch
      %74 = sbr.rel (0) target = $region33
    $region32: #{tpu_custom_call.1} parent=1 // pred_region
      %76 = vsyncadd [#allocation9], 0
      %s78 = sshll.u32 %s7, 4
      %s79 = int_to_ptr.hbm [resolvable:$true] %s78
      %s80 = sshll.u32 [#allocation10], 4
      %s81 = int_to_ptr.vmem [resolvable:$true] %s80
      %83 = dma.hbm_to_vmem [thread:$0]  %s79, 48, %s81, [#allocation9]
    $region33: #{tpu_custom_call.1} parent=1 // pred_fallthru
      _
    // Predicated region
    $region34: #{tpu_custom_call.1} parent=1 // pred_check
      _
    $region35: #{tpu_custom_call.1} parent=1 // pred_check_branch
      %85 = sbr.rel (0) target = $region37
    $region36: #{tpu_custom_call.1} parent=1 // pred_region
      _
    $region37: #{tpu_custom_call.1} parent=1 // pred_fallthru
      _
    // Predicated region
    $region38: #{tpu_custom_call.1} parent=1 // pred_check
      _
    $region39: #{tpu_custom_call.1} parent=1 // pred_check_branch
      %87 = sbr.rel (0) target = $region41
    $region40: #{tpu_custom_call.1} parent=1 // pred_region
      %89 = dma.done [#allocation4], 128
    $region41: #{tpu_custom_call.1} parent=1 // pred_fallthru
      _
    // Predicated region
    $region42: #{tpu_custom_call.1} parent=1 // pred_check
      _
    $region43: #{tpu_custom_call.1} parent=1 // pred_check_branch
      %91 = sbr.rel (0) target = $region45
    $region44: #{tpu_custom_call.1} parent=1 // pred_region
      %93 = dma.done [#allocation6], 1024
    $region45: #{tpu_custom_call.1} parent=1 // pred_fallthru
      _
    // Predicated region
    $region46: #{tpu_custom_call.1} parent=1 // pred_check
      _
    $region47: #{tpu_custom_call.1} parent=1 // pred_check_branch
      %95 = sbr.rel (0) target = $region49
    $region48: #{tpu_custom_call.1} parent=1 // pred_region
      %97 = dma.done [#allocation6], 64
    $region49: #{tpu_custom_call.1} parent=1 // pred_fallthru
      _
    // Predicated region
    $region50: #{tpu_custom_call.1} parent=1 // pred_check
      _
    $region51: #{tpu_custom_call.1} parent=1 // pred_check_branch
      %99 = sbr.rel (0) target = $region53
    $region52: #{tpu_custom_call.1} parent=1 // pred_region
      %101 = dma.done [#allocation9], 24576
    $region53: #{tpu_custom_call.1} parent=1 // pred_fallthru
      _
    // Predicated region
    $region54: #{tpu_custom_call.1} parent=1 // pred_check
      _
    $region55: #{tpu_custom_call.1} parent=1 // pred_check_branch
      %103 = sbr.rel (0) target = $region57
    $region56: #{tpu_custom_call.1} parent=1 // pred_region
      %105 = dma.done [#allocation9], 48
    $region57: #{tpu_custom_call.1} parent=1 // pred_fallthru
      _
    %v106 = vld [vmem:[#allocation3] sm:$0xff]
    %v107 = vld [vmem:[%s1] sm:$0xff]
    %v108 = vld [vmem:[#allocation5] sm:$0xff]
    %v109 = vld [vmem:[#allocation5 + $0x8] sm:$0xff]
    %v110 = vld [vmem:[#allocation5 + $0x10] sm:$0xff]
    %v111 = vld [vmem:[#allocation5 + $0x18] sm:$0xff]
    %v112 = vld [vmem:[#allocation5 + $0x20] sm:$0xff]
    %v113 = vld [vmem:[#allocation5 + $0x28] sm:$0xff]
    %v114 = vld [vmem:[#allocation5 + $0x30] sm:$0xff]
    %v115 = vld [vmem:[#allocation5 + $0x38] sm:$0xff]
    %v116 = vld [vmem:[%s3] sm:$0xff]
    %v117 = vld [vmem:[%s3 + $0x8] sm:$0xff]
    %120 = vst [vmem:[#allocation1] ss:$2 sm:$0xff] %v116
    %s121 = scalar_lea.vmem [#allocation1], 16
    %122 = vst [vmem:[%s121] ss:$2 sm:$0xff] %v117
    %v123 = vld.sshfl [vmem:[#allocation1] sm:$0xff pattern:$0x75316420]
    %v124 = vld.sshfl [vmem:[#allocation1 + $0x8] sm:$0xff pattern:$0x75316420]
    %v125 = vld.sshfl [vmem:[#allocation1 + $0x10] sm:$0xff pattern:$0x75316420]
    %v126 = vld.sshfl [vmem:[#allocation1 + $0x18] sm:$0xff pattern:$0x75316420]
    %vm127 = vcmask 31744
    %v129 = vsel %vm127, %v107, 0
    %vm131 = vcmask 1043456
    %v132 = vsel %vm131, %v123, 0
    %v134 = vsel %vm131, %v124, 0
    %v136 = vsel %vm131, %v125, 0
    %v138 = vsel %vm131, %v126, 0
    %140 = vmatpush.msra.mxu0 0.0
    %141 = vmatpush.msra.mxu0 0.0
    %142 = vmatpush.msra.mxu0 0.0
    %143 = vmatpush.msra.mxu0 0.0
    %144 = vmatpush.msra.mxu0 0.0
    %145 = vmatpush.msra.mxu0 0.0
    %146 = vmatpush.msra.mxu0 0.0
    %147 = vmatpush.msra.mxu0 0.0
    %148 = vmatpush.msra.mxu0 0.0
    %149 = vmatpush.msra.mxu0 0.0
    %150 = vmatpush.msra.mxu0 0.0
    %151 = vmatpush.msra.mxu0 0.0
    %152 = vmatpush.msra.mxu0 0.0
    %153 = vmatpush.msra.mxu0 0.0
    %154 = vmatpush.msra.mxu0 0.0
    %155 = vmatpush.msra.mxu0 %v132
    %156 = vmatmul.f32.gmra.mxu0 %v129
    %v157 = vpop.f32.mrf.mxu0
    %v158 = vadd.f32 0.0, %v157
    %159 = vdwg.mxu0
    %160 = vmatpush.msra.mxu0 0.0
    %161 = vmatpush.msra.mxu0 0.0
    %162 = vmatpush.msra.mxu0 0.0
    %163 = vmatpush.msra.mxu0 0.0
    %164 = vmatpush.msra.mxu0 0.0
    %165 = vmatpush.msra.mxu0 0.0
    %166 = vmatpush.msra.mxu0 0.0
    %167 = vmatpush.msra.mxu0 0.0
    %168 = vmatpush.msra.mxu0 0.0
    %169 = vmatpush.msra.mxu0 0.0
    %170 = vmatpush.msra.mxu0 0.0
    %171 = vmatpush.msra.mxu0 0.0
    %172 = vmatpush.msra.mxu0 0.0
    %173 = vmatpush.msra.mxu0 0.0
    %174 = vmatpush.msra.mxu0 0.0
    %175 = vmatpush.msra.mxu0 %v134
    %176 = vmatmul.f32.gmra.mxu0 %v129
    %v177 = vpop.f32.mrf.mxu0
    %v178 = vadd.f32 0.0, %v177
    %179 = vdwg.mxu0
    %180 = vmatpush.msra.mxu0 0.0
    %181 = vmatpush.msra.mxu0 0.0
    %182 = vmatpush.msra.mxu0 0.0
    %183 = vmatpush.msra.mxu0 0.0
    %184 = vmatpush.msra.mxu0 0.0
    %185 = vmatpush.msra.mxu0 0.0
    %186 = vmatpush.msra.mxu0 0.0
    %187 = vmatpush.msra.mxu0 0.0
    %188 = vmatpush.msra.mxu0 0.0
    %189 = vmatpush.msra.mxu0 0.0
    %190 = vmatpush.msra.mxu0 0.0
    %191 = vmatpush.msra.mxu0 0.0
    %192 = vmatpush.msra.mxu0 0.0
    %193 = vmatpush.msra.mxu0 0.0
    %194 = vmatpush.msra.mxu0 0.0
    %195 = vmatpush.msra.mxu0 %v136
    %196 = vmatmul.f32.gmra.mxu0 %v129
    %v197 = vpop.f32.mrf.mxu0
    %v198 = vadd.f32 0.0, %v197
    %199 = vdwg.mxu0
    %200 = vmatpush.msra.mxu0 0.0
    %201 = vmatpush.msra.mxu0 0.0
    %202 = vmatpush.msra.mxu0 0.0
    %203 = vmatpush.msra.mxu0 0.0
    %204 = vmatpush.msra.mxu0 0.0
    %205 = vmatpush.msra.mxu0 0.0
    %206 = vmatpush.msra.mxu0 0.0
    %207 = vmatpush.msra.mxu0 0.0
    %208 = vmatpush.msra.mxu0 0.0
    %209 = vmatpush.msra.mxu0 0.0
    %210 = vmatpush.msra.mxu0 0.0
    %211 = vmatpush.msra.mxu0 0.0
    %212 = vmatpush.msra.mxu0 0.0
    %213 = vmatpush.msra.mxu0 0.0
    %214 = vmatpush.msra.mxu0 0.0
    %215 = vmatpush.msra.mxu0 %v138
    %216 = vmatmul.f32.gmra.mxu0 %v129
    %v217 = vpop.f32.mrf.mxu0
    %v218 = vadd.f32 0.0, %v217
    %219 = vdwg.mxu0
    %vm220 = vcmask 130048
    %v222 = vsel %vm220, %v106, 0
    %224 = vmatpush.msra.mxu0 0.0
    %225 = vmatpush.msra.mxu0 0.0
    %226 = vmatpush.msra.mxu0 0.0
    %227 = vmatpush.msra.mxu0 0.0
    %228 = vmatpush.msra.mxu0 0.0
    %229 = vmatpush.msra.mxu0 0.0
    %230 = vmatpush.msra.mxu0 0.0
    %231 = vmatpush.msra.mxu0 0.0
    %232 = vmatpush.msra.mxu0 0.0
    %233 = vmatpush.msra.mxu0 0.0
    %234 = vmatpush.msra.mxu0 0.0
    %235 = vmatpush.msra.mxu0 0.0
    %236 = vmatpush.msra.mxu0 0.0
    %237 = vmatpush.msra.mxu0 0.0
    %238 = vmatpush.msra.mxu0 %v112
    %239 = vmatpush.msra.mxu0 %v108
    %240 = vmatmul.f32.gmra.mxu0 %v222
    %v241 = vpop.f32.mrf.mxu0
    %v242 = vadd.f32 %v158, %v241
    %243 = vdwg.mxu0
    %244 = vmatpush.msra.mxu0 0.0
    %245 = vmatpush.msra.mxu0 0.0
    %246 = vmatpush.msra.mxu0 0.0
    %247 = vmatpush.msra.mxu0 0.0
    %248 = vmatpush.msra.mxu0 0.0
    %249 = vmatpush.msra.mxu0 0.0
    %250 = vmatpush.msra.mxu0 0.0
    %251 = vmatpush.msra.mxu0 0.0
    %252 = vmatpush.msra.mxu0 0.0
    %253 = vmatpush.msra.mxu0 0.0
    %254 = vmatpush.msra.mxu0 0.0
    %255 = vmatpush.msra.mxu0 0.0
    %256 = vmatpush.msra.mxu0 0.0
    %257 = vmatpush.msra.mxu0 0.0
    %258 = vmatpush.msra.mxu0 %v113
    %259 = vmatpush.msra.mxu0 %v109
    %260 = vmatmul.f32.gmra.mxu0 %v222
    %v261 = vpop.f32.mrf.mxu0
    %v262 = vadd.f32 %v178, %v261
    %263 = vdwg.mxu0
    %264 = vmatpush.msra.mxu0 0.0
    %265 = vmatpush.msra.mxu0 0.0
    %266 = vmatpush.msra.mxu0 0.0
    %267 = vmatpush.msra.mxu0 0.0
    %268 = vmatpush.msra.mxu0 0.0
    %269 = vmatpush.msra.mxu0 0.0
    %270 = vmatpush.msra.mxu0 0.0
    %271 = vmatpush.msra.mxu0 0.0
    %272 = vmatpush.msra.mxu0 0.0
    %273 = vmatpush.msra.mxu0 0.0
    %274 = vmatpush.msra.mxu0 0.0
    %275 = vmatpush.msra.mxu0 0.0
    %276 = vmatpush.msra.mxu0 0.0
    %277 = vmatpush.msra.mxu0 0.0
    %278 = vmatpush.msra.mxu0 %v114
    %279 = vmatpush.msra.mxu0 %v110
    %280 = vmatmul.f32.gmra.mxu0 %v222
    %v281 = vpop.f32.mrf.mxu0
    %v282 = vadd.f32 %v198, %v281
    %283 = vdwg.mxu0
    %284 = vmatpush.msra.mxu0 0.0
    %285 = vmatpush.msra.mxu0 0.0
    %286 = vmatpush.msra.mxu0 0.0
    %287 = vmatpush.msra.mxu0 0.0
    %288 = vmatpush.msra.mxu0 0.0
    %289 = vmatpush.msra.mxu0 0.0
    %290 = vmatpush.msra.mxu0 0.0
    %291 = vmatpush.msra.mxu0 0.0
    %292 = vmatpush.msra.mxu0 0.0
    %293 = vmatpush.msra.mxu0 0.0
    %294 = vmatpush.msra.mxu0 0.0
    %295 = vmatpush.msra.mxu0 0.0
    %296 = vmatpush.msra.mxu0 0.0
    %297 = vmatpush.msra.mxu0 0.0
    %298 = vmatpush.msra.mxu0 %v115
    %299 = vmatpush.msra.mxu0 %v111
    %300 = vmatmul.f32.gmra.mxu0 %v222
    %v301 = vpop.f32.mrf.mxu0
    %v302 = vadd.f32 %v218, %v301
    %303 = vdwg.mxu0
    %v304 = vld [vmem:[#allocation7] sm:$0xf]
    %v306 = vperm.slane %v304, 0
    %v307 = vperm.slane %v304, 1
    %v308 = vperm.slane %v304, 2
    %v309 = vperm.slane %v304, 3
    %v314 = vadd.f32 %v242, %v306
    %v315 = vadd.f32 %v262, %v307
    %v316 = vadd.f32 %v282, %v308
    %v317 = vadd.f32 %v302, %v309
    %v318 = vmax.f32 %v314, 0.0
    %v319 = vmax.f32 %v315, 0.0
    %v320 = vmax.f32 %v316, 0.0
    %v321 = vmax.f32 %v317, 0.0
    %v322 = vld [vmem:[#allocation8] sm:$0xff]
    %v323 = vld [vmem:[#allocation8 + $0x8] sm:$0xff]
    %v324 = vld [vmem:[#allocation8 + $0x10] sm:$0xff]
    %v325 = vld [vmem:[#allocation8 + $0x18] sm:$0xff]
    %v326 = vld [vmem:[#allocation8 + $0x20] sm:$0xff]
    %v327 = vld [vmem:[#allocation8 + $0x28] sm:$0xff]
    %v328 = vld [vmem:[#allocation8 + $0x30] sm:$0xff]
    %v329 = vld [vmem:[#allocation8 + $0x38] sm:$0xff]
    %v330 = vld [vmem:[#allocation8 + $0x40] sm:$0xff]
    %v331 = vld [vmem:[#allocation8 + $0x48] sm:$0xff]
    %v332 = vld [vmem:[#allocation8 + $0x50] sm:$0xff]
    %v333 = vld [vmem:[#allocation8 + $0x58] sm:$0xff]
    %v334 = vld [vmem:[#allocation8 + $0x60] sm:$0xff]
    %v335 = vld [vmem:[#allocation8 + $0x68] sm:$0xff]
    %v336 = vld [vmem:[#allocation8 + $0x70] sm:$0xff]
    %v337 = vld [vmem:[#allocation8 + $0x78] sm:$0xff]
    %v338 = vld [vmem:[#allocation8 + $0x80] sm:$0xff]
    %v339 = vld [vmem:[#allocation8 + $0x88] sm:$0xff]
    %v340 = vld [vmem:[#allocation8 + $0x90] sm:$0xff]
    %v341 = vld [vmem:[#allocation8 + $0x98] sm:$0xff]
    %v342 = vld [vmem:[#allocation8 + $0xa0] sm:$0xff]
    %v343 = vld [vmem:[#allocation8 + $0xa8] sm:$0xff]
    %v344 = vld [vmem:[#allocation8 + $0xb0] sm:$0xff]
    %v345 = vld [vmem:[#allocation8 + $0xb8] sm:$0xff]
    %v346 = vld [vmem:[#allocation8 + $0xc0] sm:$0xff]
    %v347 = vld [vmem:[#allocation8 + $0xc8] sm:$0xff]
    %v348 = vld [vmem:[#allocation8 + $0xd0] sm:$0xff]
    %v349 = vld [vmem:[#allocation8 + $0xd8] sm:$0xff]
    %v350 = vld [vmem:[#allocation8 + $0xe0] sm:$0xff]
    %v351 = vld [vmem:[#allocation8 + $0xe8] sm:$0xff]
    %v352 = vld [vmem:[#allocation8 + $0xf0] sm:$0xff]
    %v353 = vld [vmem:[#allocation8 + $0xf8] sm:$0xff]
    %v354 = vld [vmem:[#allocation8 + $0x100] sm:$0xff]
    %v355 = vld [vmem:[#allocation8 + $0x108] sm:$0xff]
    %v356 = vld [vmem:[#allocation8 + $0x110] sm:$0xff]
    %v357 = vld [vmem:[#allocation8 + $0x118] sm:$0xff]
    %v358 = vld [vmem:[#allocation8 + $0x120] sm:$0xff]
    %v359 = vld [vmem:[#allocation8 + $0x128] sm:$0xff]
    %v360 = vld [vmem:[#allocation8 + $0x130] sm:$0xff]
    %v361 = vld [vmem:[#allocation8 + $0x138] sm:$0xff]
    %v362 = vld [vmem:[#allocation8 + $0x140] sm:$0xff]
    %v363 = vld [vmem:[#allocation8 + $0x148] sm:$0xff]
    %v364 = vld [vmem:[#allocation8 + $0x150] sm:$0xff]
    %v365 = vld [vmem:[#allocation8 + $0x158] sm:$0xff]
    %v366 = vld [vmem:[#allocation8 + $0x160] sm:$0xff]
    %v367 = vld [vmem:[#allocation8 + $0x168] sm:$0xff]
    %v368 = vld [vmem:[#allocation8 + $0x170] sm:$0xff]
    %v369 = vld [vmem:[#allocation8 + $0x178] sm:$0xff]
    %v370 = vld [vmem:[#allocation8 + $0x180] sm:$0xff]
    %v371 = vld [vmem:[#allocation8 + $0x188] sm:$0xff]
    %v372 = vld [vmem:[#allocation8 + $0x190] sm:$0xff]
    %v373 = vld [vmem:[#allocation8 + $0x198] sm:$0xff]
    %v374 = vld [vmem:[#allocation8 + $0x1a0] sm:$0xff]
    %v375 = vld [vmem:[#allocation8 + $0x1a8] sm:$0xff]
    %v376 = vld [vmem:[#allocation8 + $0x1b0] sm:$0xff]
    %v377 = vld [vmem:[#allocation8 + $0x1b8] sm:$0xff]
    %v378 = vld [vmem:[#allocation8 + $0x1c0] sm:$0xff]
    %v379 = vld [vmem:[#allocation8 + $0x1c8] sm:$0xff]
    %v380 = vld [vmem:[#allocation8 + $0x1d0] sm:$0xff]
    %v381 = vld [vmem:[#allocation8 + $0x1d8] sm:$0xff]
    %v382 = vld [vmem:[#allocation8 + $0x1e0] sm:$0xff]
    %v383 = vld [vmem:[#allocation8 + $0x1e8] sm:$0xff]
    %v384 = vld [vmem:[#allocation8 + $0x1f0] sm:$0xff]
    %v385 = vld [vmem:[#allocation8 + $0x1f8] sm:$0xff]
    %v386 = vld [vmem:[#allocation8 + $0x200] sm:$0xff]
    %v387 = vld [vmem:[#allocation8 + $0x208] sm:$0xff]
    %v388 = vld [vmem:[#allocation8 + $0x210] sm:$0xff]
    %v389 = vld [vmem:[#allocation8 + $0x218] sm:$0xff]
    %v390 = vld [vmem:[#allocation8 + $0x220] sm:$0xff]
    %v391 = vld [vmem:[#allocation8 + $0x228] sm:$0xff]
    %v392 = vld [vmem:[#allocation8 + $0x230] sm:$0xff]
    %v393 = vld [vmem:[#allocation8 + $0x238] sm:$0xff]
    %v394 = vld [vmem:[#allocation8 + $0x240] sm:$0xff]
    %v395 = vld [vmem:[#allocation8 + $0x248] sm:$0xff]
    %v396 = vld [vmem:[#allocation8 + $0x250] sm:$0xff]
    %v397 = vld [vmem:[#allocation8 + $0x258] sm:$0xff]
    %v398 = vld [vmem:[#allocation8 + $0x260] sm:$0xff]
    %v399 = vld [vmem:[#allocation8 + $0x268] sm:$0xff]
    %v400 = vld [vmem:[#allocation8 + $0x270] sm:$0xff]
    %v401 = vld [vmem:[#allocation8 + $0x278] sm:$0xff]
    %v402 = vld [vmem:[#allocation8 + $0x280] sm:$0xff]
    %v403 = vld [vmem:[#allocation8 + $0x288] sm:$0xff]
    %v404 = vld [vmem:[#allocation8 + $0x290] sm:$0xff]
    %v405 = vld [vmem:[#allocation8 + $0x298] sm:$0xff]
    %v406 = vld [vmem:[#allocation8 + $0x2a0] sm:$0xff]
    %v407 = vld [vmem:[#allocation8 + $0x2a8] sm:$0xff]
    %v408 = vld [vmem:[#allocation8 + $0x2b0] sm:$0xff]
    %v409 = vld [vmem:[#allocation8 + $0x2b8] sm:$0xff]
    %v410 = vld [vmem:[#allocation8 + $0x2c0] sm:$0xff]
    %v411 = vld [vmem:[#allocation8 + $0x2c8] sm:$0xff]
    %v412 = vld [vmem:[#allocation8 + $0x2d0] sm:$0xff]
    %v413 = vld [vmem:[#allocation8 + $0x2d8] sm:$0xff]
    %v414 = vld [vmem:[#allocation8 + $0x2e0] sm:$0xff]
    %v415 = vld [vmem:[#allocation8 + $0x2e8] sm:$0xff]
    %v416 = vld [vmem:[#allocation8 + $0x2f0] sm:$0xff]
    %v417 = vld [vmem:[#allocation8 + $0x2f8] sm:$0xff]
    %v418 = vld [vmem:[#allocation8 + $0x300] sm:$0xff]
    %v419 = vld [vmem:[#allocation8 + $0x308] sm:$0xff]
    %v420 = vld [vmem:[#allocation8 + $0x310] sm:$0xff]
    %v421 = vld [vmem:[#allocation8 + $0x318] sm:$0xff]
    %v422 = vld [vmem:[#allocation8 + $0x320] sm:$0xff]
    %v423 = vld [vmem:[#allocation8 + $0x328] sm:$0xff]
    %v424 = vld [vmem:[#allocation8 + $0x330] sm:$0xff]
    %v425 = vld [vmem:[#allocation8 + $0x338] sm:$0xff]
    %v426 = vld [vmem:[#allocation8 + $0x340] sm:$0xff]
    %v427 = vld [vmem:[#allocation8 + $0x348] sm:$0xff]
    %v428 = vld [vmem:[#allocation8 + $0x350] sm:$0xff]
    %v429 = vld [vmem:[#allocation8 + $0x358] sm:$0xff]
    %v430 = vld [vmem:[#allocation8 + $0x360] sm:$0xff]
    %v431 = vld [vmem:[#allocation8 + $0x368] sm:$0xff]
    %v432 = vld [vmem:[#allocation8 + $0x370] sm:$0xff]
    %v433 = vld [vmem:[#allocation8 + $0x378] sm:$0xff]
    %v434 = vld [vmem:[#allocation8 + $0x380] sm:$0xff]
    %v435 = vld [vmem:[#allocation8 + $0x388] sm:$0xff]
    %v436 = vld [vmem:[#allocation8 + $0x390] sm:$0xff]
    %v437 = vld [vmem:[#allocation8 + $0x398] sm:$0xff]
    %v438 = vld [vmem:[#allocation8 + $0x3a0] sm:$0xff]
    %v439 = vld [vmem:[#allocation8 + $0x3a8] sm:$0xff]
    %v440 = vld [vmem:[#allocation8 + $0x3b0] sm:$0xff]
    %v441 = vld [vmem:[#allocation8 + $0x3b8] sm:$0xff]
    %v442 = vld [vmem:[#allocation8 + $0x3c0] sm:$0xff]
    %v443 = vld [vmem:[#allocation8 + $0x3c8] sm:$0xff]
    %v444 = vld [vmem:[#allocation8 + $0x3d0] sm:$0xff]
    %v445 = vld [vmem:[#allocation8 + $0x3d8] sm:$0xff]
    %v446 = vld [vmem:[#allocation8 + $0x3e0] sm:$0xff]
    %v447 = vld [vmem:[#allocation8 + $0x3e8] sm:$0xff]
    %v448 = vld [vmem:[#allocation8 + $0x3f0] sm:$0xff]
    %v449 = vld [vmem:[#allocation8 + $0x3f8] sm:$0xff]
    %v450 = vld [vmem:[#allocation8 + $0x400] sm:$0xff]
    %v451 = vld [vmem:[#allocation8 + $0x408] sm:$0xff]
    %v452 = vld [vmem:[#allocation8 + $0x410] sm:$0xff]
    %v453 = vld [vmem:[#allocation8 + $0x418] sm:$0xff]
    %v454 = vld [vmem:[#allocation8 + $0x420] sm:$0xff]
    %v455 = vld [vmem:[#allocation8 + $0x428] sm:$0xff]
    %v456 = vld [vmem:[#allocation8 + $0x430] sm:$0xff]
    %v457 = vld [vmem:[#allocation8 + $0x438] sm:$0xff]
    %v458 = vld [vmem:[#allocation8 + $0x440] sm:$0xff]
    %v459 = vld [vmem:[#allocation8 + $0x448] sm:$0xff]
    %v460 = vld [vmem:[#allocation8 + $0x450] sm:$0xff]
    %v461 = vld [vmem:[#allocation8 + $0x458] sm:$0xff]
    %v462 = vld [vmem:[#allocation8 + $0x460] sm:$0xff]
    %v463 = vld [vmem:[#allocation8 + $0x468] sm:$0xff]
    %v464 = vld [vmem:[#allocation8 + $0x470] sm:$0xff]
    %v465 = vld [vmem:[#allocation8 + $0x478] sm:$0xff]
    %v466 = vld [vmem:[#allocation8 + $0x480] sm:$0xff]
    %v467 = vld [vmem:[#allocation8 + $0x488] sm:$0xff]
    %v468 = vld [vmem:[#allocation8 + $0x490] sm:$0xff]
    %v469 = vld [vmem:[#allocation8 + $0x498] sm:$0xff]
    %v470 = vld [vmem:[#allocation8 + $0x4a0] sm:$0xff]
    %v471 = vld [vmem:[#allocation8 + $0x4a8] sm:$0xff]
    %v472 = vld [vmem:[#allocation8 + $0x4b0] sm:$0xff]
    %v473 = vld [vmem:[#allocation8 + $0x4b8] sm:$0xff]
    %v474 = vld [vmem:[#allocation8 + $0x4c0] sm:$0xff]
    %v475 = vld [vmem:[#allocation8 + $0x4c8] sm:$0xff]
    %v476 = vld [vmem:[#allocation8 + $0x4d0] sm:$0xff]
    %v477 = vld [vmem:[#allocation8 + $0x4d8] sm:$0xff]
    %v478 = vld [vmem:[#allocation8 + $0x4e0] sm:$0xff]
    %v479 = vld [vmem:[#allocation8 + $0x4e8] sm:$0xff]
    %v480 = vld [vmem:[#allocation8 + $0x4f0] sm:$0xff]
    %v481 = vld [vmem:[#allocation8 + $0x4f8] sm:$0xff]
    %v482 = vld [vmem:[#allocation8 + $0x500] sm:$0xff]
    %v483 = vld [vmem:[#allocation8 + $0x508] sm:$0xff]
    %v484 = vld [vmem:[#allocation8 + $0x510] sm:$0xff]
    %v485 = vld [vmem:[#allocation8 + $0x518] sm:$0xff]
    %v486 = vld [vmem:[#allocation8 + $0x520] sm:$0xff]
    %v487 = vld [vmem:[#allocation8 + $0x528] sm:$0xff]
    %v488 = vld [vmem:[#allocation8 + $0x530] sm:$0xff]
    %v489 = vld [vmem:[#allocation8 + $0x538] sm:$0xff]
    %v490 = vld [vmem:[#allocation8 + $0x540] sm:$0xff]
    %v491 = vld [vmem:[#allocation8 + $0x548] sm:$0xff]
    %v492 = vld [vmem:[#allocation8 + $0x550] sm:$0xff]
    %v493 = vld [vmem:[#allocation8 + $0x558] sm:$0xff]
    %v494 = vld [vmem:[#allocation8 + $0x560] sm:$0xff]
    %v495 = vld [vmem:[#allocation8 + $0x568] sm:$0xff]
    %v496 = vld [vmem:[#allocation8 + $0x570] sm:$0xff]
    %v497 = vld [vmem:[#allocation8 + $0x578] sm:$0xff]
    %v498 = vld [vmem:[#allocation8 + $0x580] sm:$0xff]
    %v499 = vld [vmem:[#allocation8 + $0x588] sm:$0xff]
    %v500 = vld [vmem:[#allocation8 + $0x590] sm:$0xff]
    %v501 = vld [vmem:[#allocation8 + $0x598] sm:$0xff]
    %v502 = vld [vmem:[#allocation8 + $0x5a0] sm:$0xff]
    %v503 = vld [vmem:[#allocation8 + $0x5a8] sm:$0xff]
    %v504 = vld [vmem:[#allocation8 + $0x5b0] sm:$0xff]
    %v505 = vld [vmem:[#allocation8 + $0x5b8] sm:$0xff]
    %v506 = vld [vmem:[#allocation8 + $0x5c0] sm:$0xff]
    %v507 = vld [vmem:[#allocation8 + $0x5c8] sm:$0xff]
    %v508 = vld [vmem:[#allocation8 + $0x5d0] sm:$0xff]
    %v509 = vld [vmem:[#allocation8 + $0x5d8] sm:$0xff]
    %v510 = vld [vmem:[#allocation8 + $0x5e0] sm:$0xff]
    %v511 = vld [vmem:[#allocation8 + $0x5e8] sm:$0xff]
    %v512 = vld [vmem:[#allocation8 + $0x5f0] sm:$0xff]
    %v513 = vld [vmem:[#allocation8 + $0x5f8] sm:$0xff]
    %v514 = vld [vmem:[%s6] sm:$0x7]
    %v516 = vperm.slane %v514, 0
    %v517 = vperm.slane %v514, 1
    %v518 = vperm.slane %v514, 2
    %522 = vmatpush.msra.mxu0 %v367
    %523 = vmatpush.msra.mxu0 %v364
    %524 = vmatpush.msra.mxu0 %v361
    %525 = vmatpush.msra.mxu0 %v358
    %526 = vmatpush.msra.mxu0 %v355
    %527 = vmatpush.msra.mxu0 %v352
    %528 = vmatpush.msra.mxu0 %v349
    %529 = vmatpush.msra.mxu0 %v346
    %530 = vmatpush.msra.mxu0 %v343
    %531 = vmatpush.msra.mxu0 %v340
    %532 = vmatpush.msra.mxu0 %v337
    %533 = vmatpush.msra.mxu0 %v334
    %534 = vmatpush.msra.mxu0 %v331
    %535 = vmatpush.msra.mxu0 %v328
    %536 = vmatpush.msra.mxu0 %v325
    %537 = vmatpush.msra.mxu0 %v322
    %538 = vmatmul.f32.gmra.mxu0 %v318
    %v539 = vpop.f32.mrf.mxu0
    %v540 = vadd.f32 %v516, %v539
    %541 = vdwg.mxu0
    %542 = vmatpush.msra.mxu0 %v415
    %543 = vmatpush.msra.mxu0 %v412
    %544 = vmatpush.msra.mxu0 %v409
    %545 = vmatpush.msra.mxu0 %v406
    %546 = vmatpush.msra.mxu0 %v403
    %547 = vmatpush.msra.mxu0 %v400
    %548 = vmatpush.msra.mxu0 %v397
    %549 = vmatpush.msra.mxu0 %v394
    %550 = vmatpush.msra.mxu0 %v391
    %551 = vmatpush.msra.mxu0 %v388
    %552 = vmatpush.msra.mxu0 %v385
    %553 = vmatpush.msra.mxu0 %v382
    %554 = vmatpush.msra.mxu0 %v379
    %555 = vmatpush.msra.mxu0 %v376
    %556 = vmatpush.msra.mxu0 %v373
    %557 = vmatpush.msra.mxu0 %v370
    %558 = vmatmul.f32.gmra.mxu0 %v319
    %v559 = vpop.f32.mrf.mxu0
    %v560 = vadd.f32 %v540, %v559
    %561 = vdwg.mxu0
    %562 = vmatpush.msra.mxu0 %v463
    %563 = vmatpush.msra.mxu0 %v460
    %564 = vmatpush.msra.mxu0 %v457
    %565 = vmatpush.msra.mxu0 %v454
    %566 = vmatpush.msra.mxu0 %v451
    %567 = vmatpush.msra.mxu0 %v448
    %568 = vmatpush.msra.mxu0 %v445
    %569 = vmatpush.msra.mxu0 %v442
    %570 = vmatpush.msra.mxu0 %v439
    %571 = vmatpush.msra.mxu0 %v436
    %572 = vmatpush.msra.mxu0 %v433
    %573 = vmatpush.msra.mxu0 %v430
    %574 = vmatpush.msra.mxu0 %v427
    %575 = vmatpush.msra.mxu0 %v424
    %576 = vmatpush.msra.mxu0 %v421
    %577 = vmatpush.msra.mxu0 %v418
    %578 = vmatmul.f32.gmra.mxu0 %v320
    %v579 = vpop.f32.mrf.mxu0
    %v580 = vadd.f32 %v560, %v579
    %581 = vdwg.mxu0
    %582 = vmatpush.msra.mxu0 %v511
    %583 = vmatpush.msra.mxu0 %v508
    %584 = vmatpush.msra.mxu0 %v505
    %585 = vmatpush.msra.mxu0 %v502
    %586 = vmatpush.msra.mxu0 %v499
    %587 = vmatpush.msra.mxu0 %v496
    %588 = vmatpush.msra.mxu0 %v493
    %589 = vmatpush.msra.mxu0 %v490
    %590 = vmatpush.msra.mxu0 %v487
    %591 = vmatpush.msra.mxu0 %v484
    %592 = vmatpush.msra.mxu0 %v481
    %593 = vmatpush.msra.mxu0 %v478
    %594 = vmatpush.msra.mxu0 %v475
    %595 = vmatpush.msra.mxu0 %v472
    %596 = vmatpush.msra.mxu0 %v469
    %597 = vmatpush.msra.mxu0 %v466
    %598 = vmatmul.f32.gmra.mxu0 %v321
    %v599 = vpop.f32.mrf.mxu0
    %v600 = vadd.f32 %v580, %v599
    %601 = vdwg.mxu0
    %602 = vmatpush.msra.mxu0 %v368
    %603 = vmatpush.msra.mxu0 %v365
    %604 = vmatpush.msra.mxu0 %v362
    %605 = vmatpush.msra.mxu0 %v359
    %606 = vmatpush.msra.mxu0 %v356
    %607 = vmatpush.msra.mxu0 %v353
    %608 = vmatpush.msra.mxu0 %v350
    %609 = vmatpush.msra.mxu0 %v347
    %610 = vmatpush.msra.mxu0 %v344
    %611 = vmatpush.msra.mxu0 %v341
    %612 = vmatpush.msra.mxu0 %v338
    %613 = vmatpush.msra.mxu0 %v335
    %614 = vmatpush.msra.mxu0 %v332
    %615 = vmatpush.msra.mxu0 %v329
    %616 = vmatpush.msra.mxu0 %v326
    %617 = vmatpush.msra.mxu0 %v323
    %618 = vmatmul.f32.gmra.mxu0 %v318
    %v619 = vpop.f32.mrf.mxu0
    %v620 = vadd.f32 %v517, %v619
    %621 = vdwg.mxu0
    %622 = vmatpush.msra.mxu0 %v416
    %623 = vmatpush.msra.mxu0 %v413
    %624 = vmatpush.msra.mxu0 %v410
    %625 = vmatpush.msra.mxu0 %v407
    %626 = vmatpush.msra.mxu0 %v404
    %627 = vmatpush.msra.mxu0 %v401
    %628 = vmatpush.msra.mxu0 %v398
    %629 = vmatpush.msra.mxu0 %v395
    %630 = vmatpush.msra.mxu0 %v392
    %631 = vmatpush.msra.mxu0 %v389
    %632 = vmatpush.msra.mxu0 %v386
    %633 = vmatpush.msra.mxu0 %v383
    %634 = vmatpush.msra.mxu0 %v380
    %635 = vmatpush.msra.mxu0 %v377
    %636 = vmatpush.msra.mxu0 %v374
    %637 = vmatpush.msra.mxu0 %v371
    %638 = vmatmul.f32.gmra.mxu0 %v319
    %v639 = vpop.f32.mrf.mxu0
    %v640 = vadd.f32 %v620, %v639
    %641 = vdwg.mxu0
    %642 = vmatpush.msra.mxu0 %v464
    %643 = vmatpush.msra.mxu0 %v461
    %644 = vmatpush.msra.mxu0 %v458
    %645 = vmatpush.msra.mxu0 %v455
    %646 = vmatpush.msra.mxu0 %v452
    %647 = vmatpush.msra.mxu0 %v449
    %648 = vmatpush.msra.mxu0 %v446
    %649 = vmatpush.msra.mxu0 %v443
    %650 = vmatpush.msra.mxu0 %v440
    %651 = vmatpush.msra.mxu0 %v437
    %652 = vmatpush.msra.mxu0 %v434
    %653 = vmatpush.msra.mxu0 %v431
    %654 = vmatpush.msra.mxu0 %v428
    %655 = vmatpush.msra.mxu0 %v425
    %656 = vmatpush.msra.mxu0 %v422
    %657 = vmatpush.msra.mxu0 %v419
    %658 = vmatmul.f32.gmra.mxu0 %v320
    %v659 = vpop.f32.mrf.mxu0
    %v660 = vadd.f32 %v640, %v659
    %661 = vdwg.mxu0
    %662 = vmatpush.msra.mxu0 %v512
    %663 = vmatpush.msra.mxu0 %v509
    %664 = vmatpush.msra.mxu0 %v506
    %665 = vmatpush.msra.mxu0 %v503
    %666 = vmatpush.msra.mxu0 %v500
    %667 = vmatpush.msra.mxu0 %v497
    %668 = vmatpush.msra.mxu0 %v494
    %669 = vmatpush.msra.mxu0 %v491
    %670 = vmatpush.msra.mxu0 %v488
    %671 = vmatpush.msra.mxu0 %v485
    %672 = vmatpush.msra.mxu0 %v482
    %673 = vmatpush.msra.mxu0 %v479
    %674 = vmatpush.msra.mxu0 %v476
    %675 = vmatpush.msra.mxu0 %v473
    %676 = vmatpush.msra.mxu0 %v470
    %677 = vmatpush.msra.mxu0 %v467
    %678 = vmatmul.f32.gmra.mxu0 %v321
    %v679 = vpop.f32.mrf.mxu0
    %v680 = vadd.f32 %v660, %v679
    %681 = vdwg.mxu0
    %682 = vmatpush.msra.mxu0 %v369
    %683 = vmatpush.msra.mxu0 %v366
    %684 = vmatpush.msra.mxu0 %v363
    %685 = vmatpush.msra.mxu0 %v360
    %686 = vmatpush.msra.mxu0 %v357
    %687 = vmatpush.msra.mxu0 %v354
    %688 = vmatpush.msra.mxu0 %v351
    %689 = vmatpush.msra.mxu0 %v348
    %690 = vmatpush.msra.mxu0 %v345
    %691 = vmatpush.msra.mxu0 %v342
    %692 = vmatpush.msra.mxu0 %v339
    %693 = vmatpush.msra.mxu0 %v336
    %694 = vmatpush.msra.mxu0 %v333
    %695 = vmatpush.msra.mxu0 %v330
    %696 = vmatpush.msra.mxu0 %v327
    %697 = vmatpush.msra.mxu0 %v324
    %698 = vmatmul.f32.gmra.mxu0 %v318
    %v699 = vpop.f32.mrf.mxu0
    %v700 = vadd.f32 %v518, %v699
    %701 = vdwg.mxu0
    %702 = vmatpush.msra.mxu0 %v417
    %703 = vmatpush.msra.mxu0 %v414
    %704 = vmatpush.msra.mxu0 %v411
    %705 = vmatpush.msra.mxu0 %v408
    %706 = vmatpush.msra.mxu0 %v405
    %707 = vmatpush.msra.mxu0 %v402
    %708 = vmatpush.msra.mxu0 %v399
    %709 = vmatpush.msra.mxu0 %v396
    %710 = vmatpush.msra.mxu0 %v393
    %711 = vmatpush.msra.mxu0 %v390
    %712 = vmatpush.msra.mxu0 %v387
    %713 = vmatpush.msra.mxu0 %v384
    %714 = vmatpush.msra.mxu0 %v381
    %715 = vmatpush.msra.mxu0 %v378
    %716 = vmatpush.msra.mxu0 %v375
    %717 = vmatpush.msra.mxu0 %v372
    %718 = vmatmul.f32.gmra.mxu0 %v319
    %v719 = vpop.f32.mrf.mxu0
    %v720 = vadd.f32 %v700, %v719
    %721 = vdwg.mxu0
    %722 = vmatpush.msra.mxu0 %v465
    %723 = vmatpush.msra.mxu0 %v462
    %724 = vmatpush.msra.mxu0 %v459
    %725 = vmatpush.msra.mxu0 %v456
    %726 = vmatpush.msra.mxu0 %v453
    %727 = vmatpush.msra.mxu0 %v450
    %728 = vmatpush.msra.mxu0 %v447
    %729 = vmatpush.msra.mxu0 %v444
    %730 = vmatpush.msra.mxu0 %v441
    %731 = vmatpush.msra.mxu0 %v438
    %732 = vmatpush.msra.mxu0 %v435
    %733 = vmatpush.msra.mxu0 %v432
    %734 = vmatpush.msra.mxu0 %v429
    %735 = vmatpush.msra.mxu0 %v426
    %736 = vmatpush.msra.mxu0 %v423
    %737 = vmatpush.msra.mxu0 %v420
    %738 = vmatmul.f32.gmra.mxu0 %v320
    %v739 = vpop.f32.mrf.mxu0
    %v740 = vadd.f32 %v720, %v739
    %741 = vdwg.mxu0
    %742 = vmatpush.msra.mxu0 %v513
    %743 = vmatpush.msra.mxu0 %v510
    %744 = vmatpush.msra.mxu0 %v507
    %745 = vmatpush.msra.mxu0 %v504
    %746 = vmatpush.msra.mxu0 %v501
    %747 = vmatpush.msra.mxu0 %v498
    %748 = vmatpush.msra.mxu0 %v495
    %749 = vmatpush.msra.mxu0 %v492
    %750 = vmatpush.msra.mxu0 %v489
    %751 = vmatpush.msra.mxu0 %v486
    %752 = vmatpush.msra.mxu0 %v483
    %753 = vmatpush.msra.mxu0 %v480
    %754 = vmatpush.msra.mxu0 %v477
    %755 = vmatpush.msra.mxu0 %v474
    %756 = vmatpush.msra.mxu0 %v471
    %757 = vmatpush.msra.mxu0 %v468
    %758 = vmatmul.f32.gmra.mxu0 %v321
    %v759 = vpop.f32.mrf.mxu0
    %v760 = vadd.f32 %v740, %v759
    %761 = vdwg.mxu0
    %v762 = vmax.f32 %v600, 0.0
    %v763 = vmax.f32 %v680, 0.0
    %v764 = vmax.f32 %v760, 0.0
    %v765 = vld [vmem:[#allocation10] sm:$0x7]
    %v767 = vperm.slane %v765, 0
    %v768 = vperm.slane %v765, 1
    %v769 = vperm.slane %v765, 2
    %v773 = vmul.f32 %v762, %v767
    %v774 = vmul.f32 %v763, %v768
    %v775 = vmul.f32 %v764, %v769
    %v776 = vadd.f32 %v773, %v774
    %v777 = vadd.f32 %v776, %v775
    %778 = vadd.xlane.f32.xlu0 %v777
    %v779 = vpop.xlane.xlu0 %778
    %v780 = vld [vmem:[#allocation2] sm:$0x1]
    %v782 = vperm.slane %v780, 0
    %v784 = vadd.f32 %v779, %v782
    %vm785 = vcmask 7168
    %786 = vst.msk [vmem:[%s9] sm:$0xff] %vm785, %v784
    // Predicated region
    $region58: #{tpu_custom_call.1} parent=1 // pred_check
      _
    $region59: #{tpu_custom_call.1} parent=1 // pred_check_branch
      %788 = sbr.rel (0) target = $region61
    $region60: #{tpu_custom_call.1} parent=1 // pred_region
      _
    $region61: #{tpu_custom_call.1} parent=1 // pred_fallthru
      _
    // Predicated region
    $region62: #{tpu_custom_call.1} parent=1 // pred_check
      _
    $region63: #{tpu_custom_call.1} parent=1 // pred_check_branch
      %790 = sbr.rel (0) target = $region65
    $region64: #{tpu_custom_call.1} parent=1 // pred_region
      _
    $region65: #{tpu_custom_call.1} parent=1 // pred_fallthru
      _
    %791 = vsyncpa [#allocation4], 1
    %792 = vsyncpa [#allocation6], 1
    %793 = vsyncpa [#allocation9], 1

</llo_original>
